<compile_context>
chip_gen: v5e
topology: v5e:2x2
jax: 0.10.0
libtpu: 0.0.40
codegen_flags: <defaults>
</compile_context>

<pallas_src>
import functools

import jax
import jax.numpy as jnp
from jax.experimental import pallas as pl
from jax.experimental.pallas import tpu as pltpu

_LANES = 128  # vreg lane width


def _partial_sum_kernel(x_ref, out_ref, acc_ref, *, tr, rows, nblk, tpc,
                        needs_mask):
    """Per-core streaming reduction.

    Grid = (num_cores, tiles_per_core).  Core `c` accumulates (8, 128)
    per-(sublane, lane) f32 partial sums of its row tiles, then collapses
    sublanes once and writes a (1, 128) lane-partial row to out block (c, 0).
    """
    c = pl.program_id(0)
    j = pl.program_id(1)

    @pl.when(j == 0)
    def _init():
        acc_ref[...] = jnp.zeros_like(acc_ref)

    xf = x_ref[...].astype(jnp.float32)  # (tr, 128), upcast in-kernel

    if needs_mask:
        # Global tile index for this core / step; the block actually loaded is
        # clamped to the last valid block (duplicate loads are fully masked).
        t = c * tpc + j
        blk = jnp.minimum(t, nblk - 1)
        row0 = blk * tr
        ri = jax.lax.broadcasted_iota(jnp.int32, (tr, 1), 0)
        valid = jnp.logical_and(row0 + ri < rows, t < nblk)
        xf = jnp.where(valid, xf, 0.0)

    # Pure VPU adds: (tr, 128) -> (tr//8, 8, 128) summed over the major axis
    # into the (8, 128) accumulator.  No cross-lane/sublane XLU work per step.
    acc_ref[...] += jnp.sum(xf.reshape(tr // 8, 8, _LANES), axis=0)

    @pl.when(j == pl.num_programs(1) - 1)
    def _finalize():
        # Single cross-sublane collapse per core; lanes stay separate.
        out_ref[...] = jnp.sum(acc_ref[...], axis=0, keepdims=True)  # (1,128)


def wasserstein_qloss(v, *, tile_rows=16384):
    """Pallas equivalent of Wasserstein_QLOSS.forward(v) == -mean(v)."""
    n = int(v.size)
    in_dtype = v.dtype
    out_dtype = in_dtype if jnp.issubdtype(in_dtype, jnp.floating) else jnp.float32
    itemsize = jnp.dtype(in_dtype).itemsize
    sub = max(8, 32 // itemsize)  # sublane multiple: 8 f32, 16 bf16, 32 int8

    flat = v.reshape(-1)  # free for contiguous inputs
    rows = n // _LANES
    bulk_elems = rows * _LANES
    tail_len = n - bulk_elems  # < 128

    # Degenerate / tiny inputs (< sub full lanes): a kernel launch is pure
    # overhead; a scalar jnp reduction is exact and trivial.
    if rows < sub:
        total = jnp.sum(flat.astype(jnp.float32))
        return (-total / n).astype(out_dtype)

    # Tail (< 128 elements) of ragged inputs: tiny wrapper-side slice + sum.
    # Only the ragged case pays for materializing the bulk slice; the common
    # 128-aligned case is a copy-free reshape of the original buffer.
    if tail_len:
        tail_sum = jnp.sum(flat[bulk_elems:].astype(jnp.float32))
        x2d = flat[:bulk_elems].reshape(rows, _LANES)
    else:
        tail_sum = None
        x2d = flat.reshape(rows, _LANES)

    # Row tile: multiple of the dtype's sublane packing, capped by `rows`.
    tr = max(sub, (int(tile_rows) // sub) * sub)
    if tr > rows:
        tr = (rows // sub) * sub  # >= sub since rows >= sub
    nblk = pl.cdiv(rows, tr)

    num_cores = min(2, nblk)           # leading "parallel" axis (v7x: 2 TCs)
    tpc = pl.cdiv(nblk, num_cores)     # tiles per core
    grid = (num_cores, tpc)

    # Mask inside the kernel iff the last tile is partial or a core gets a
    # redundant (clamped) tile.  Nicely shaped inputs skip masking entirely.
    needs_mask = (nblk * tr != rows) or (num_cores * tpc != nblk)

    if num_cores * tpc == nblk:
        in_index = lambda c, j: (c * tpc + j, 0)
    else:
        in_index = lambda c, j: (jnp.minimum(c * tpc + j, nblk - 1), 0)

    partials = pl.pallas_call(
        functools.partial(_partial_sum_kernel, tr=tr, rows=rows, nblk=nblk,
                          tpc=tpc, needs_mask=needs_mask),
        out_shape=jax.ShapeDtypeStruct((num_cores, _LANES), jnp.float32),
        grid=grid,
        in_specs=[pl.BlockSpec((tr, _LANES), in_index)],
        # Output block depends only on the core axis -> VMEM resident across
        # the "arbitrary" reduction axis; written once in each core's finalize.
        out_specs=pl.BlockSpec((1, _LANES), lambda c, j: (c, 0)),
        scratch_shapes=[pltpu.VMEM((8, _LANES), jnp.float32)],
        compiler_params=pltpu.CompilerParams(
            dimension_semantics=("parallel", "arbitrary"),
            # tile <= 8 MiB, x2 double buffer + tiny scratch/output << 32 MiB:
            # safe on v5e/v6e (128 MiB VMEM) and v7x (64 MiB VMEM).
            vmem_limit_bytes=32 * 1024 * 1024,
        ),
        cost_estimate=pl.CostEstimate(
            flops=bulk_elems,
            transcendentals=0,
            bytes_accessed=bulk_elems * itemsize + num_cores * _LANES * 4,
        ),
    )(x2d)

    total = jnp.sum(partials)          # tiny (num_cores, 128) cross-lane reduce
    if tail_sum is not None:
        total = total + tail_sum
    # Scale / negate by the TRUE element count in the wrapper (scalar, free).
    return (-total / n).astype(out_dtype)


if __name__ == "__main__":
    key = jax.random.PRNGKey(0)
    k1, k2, k3, k4, k5 = jax.random.split(key, 5)

    # (1) Module-style input: lane-aligned n=2048, single tile, single core.
    v1 = jax.random.normal(k1, (2, 4, 16, 16), dtype=jnp.float32)
    loss1 = jax.block_until_ready(wasserstein_qloss(v1))
    ref1 = -jnp.mean(v1)
    assert loss1.shape == ()
    assert jnp.allclose(loss1, ref1, atol=1e-5, rtol=1e-5), (loss1, ref1)

    # (2) Ragged n=2709 (= 21*128 + 21): in-kernel row masking + tiny tail sum.
    v2 = jax.random.normal(k2, (3, 7, 129), dtype=jnp.float32)
    loss2 = jax.block_until_ready(wasserstein_qloss(v2))
    ref2 = -jnp.mean(v2)
    assert jnp.allclose(loss2, ref2, atol=1e-5, rtol=1e-5), (loss2, ref2)

    # (3) Multi-tile with odd tile count and non-multiple-of-8 tile_rows:
    #     exercises tile rounding, the clamped 2-core split, and masking.
    v3 = jax.random.normal(k3, (48, 1024), dtype=jnp.float32)
    loss3 = jax.block_until_ready(wasserstein_qloss(v3, tile_rows=140))
    ref3 = -jnp.mean(v3)
    assert jnp.allclose(loss3, ref3, atol=1e-5, rtol=1e-5), (loss3, ref3)

    # (4) bf16 input streamed in native dtype (16-row sublane multiple),
    #     upcast to f32 inside the kernel.
    v4 = jax.random.normal(k4, (4, 8, 128), dtype=jnp.bfloat16)
    loss4 = jax.block_until_ready(wasserstein_qloss(v4))
    ref4 = -jnp.mean(v4.astype(jnp.float32))
    assert jnp.allclose(loss4.astype(jnp.float32), ref4, atol=1e-2, rtol=1e-2), (loss4, ref4)

    # (5) Tiny input (< 8 full lanes): pure scalar fallback path.
    v5 = jax.random.normal(k5, (3, 5, 7), dtype=jnp.float32)
    loss5 = jax.block_until_ready(wasserstein_qloss(v5))
    ref5 = -jnp.mean(v5)
    assert jnp.allclose(loss5, ref5, atol=1e-5, rtol=1e-5), (loss5, ref5)

    print("KERNEL_OK")
</pallas_src>

<mosaic_0001>
module attributes {stable_mosaic.version = 11 : i64} {
  func.func @_partial_sum_kernel(%arg0: i32, %arg1: i32, %arg2: memref<16x128xf32, #tpu.memory_space<vmem>>, %arg3: memref<1x128xf32, #tpu.memory_space<vmem>>, %arg4: memref<8x128xf32, #tpu.memory_space<vmem>>) attributes {dimension_semantics = [#tpu.dimension_semantics<parallel>, #tpu.dimension_semantics<arbitrary>], iteration_bounds = array<i64: 1, 1>, scalar_prefetch = 0 : i64, scratch_operands = 1 : i64, tpu.core_type = #tpu.core_type<tc>, window_params = [{transform_indices = @transform_0, window_bounds = array<i64: 16, 128>}, {transform_indices = @transform_1, window_bounds = array<i64: 1, 128>}]} {
    %c0_i32 = arith.constant 0 : i32
    %0 = arith.cmpi eq, %arg1, %c0_i32 : i32
    %1 = arith.extui %0 : i1 to i32
    %c0_i32_0 = arith.constant 0 : i32
    %2 = arith.cmpi ne, %1, %c0_i32_0 : i32
    scf.if %2 {
      %cst_8 = arith.constant 0.000000e+00 : f32
      %12 = vector.broadcast %cst_8 : f32 to vector<8x128xf32>
      %c0_9 = arith.constant 0 : index
      %c0_10 = arith.constant 0 : index
      %13 = vector.load %arg4[%c0_9, %c0_10] : memref<8x128xf32, #tpu.memory_space<vmem>>, vector<8x128xf32>
      tpu.vector_store %arg4[%c0_9, %c0_10], %12 {strides = array<i32>} : memref<8x128xf32, #tpu.memory_space<vmem>>, vector<8x128xf32>,
    } else {
    }
    %c0 = arith.constant 0 : index
    %c0_1 = arith.constant 0 : index
    %3 = vector.load %arg2[%c0, %c0_1] : memref<16x128xf32, #tpu.memory_space<vmem>>, vector<16x128xf32>
    %c0_2 = arith.constant 0 : index
    %c0_3 = arith.constant 0 : index
    %4 = vector.load %arg4[%c0_2, %c0_3] : memref<8x128xf32, #tpu.memory_space<vmem>>, vector<8x128xf32>
    %5 = vector.shape_cast %3 : vector<16x128xf32> to vector<2x8x128xf32>
    %cst = arith.constant dense<0.000000e+00> : vector<8x128xf32>
    %6 = vector.multi_reduction <add>, %5, %cst [0] : vector<2x8x128xf32> to vector<8x128xf32>
    %7 = arith.addf %4, %6 : vector<8x128xf32>
    %c0_4 = arith.constant 0 : index
    %c0_5 = arith.constant 0 : index
    %8 = vector.load %arg4[%c0_4, %c0_5] : memref<8x128xf32, #tpu.memory_space<vmem>>, vector<8x128xf32>
    tpu.vector_store %arg4[%c0_4, %c0_5], %7 {strides = array<i32>} : memref<8x128xf32, #tpu.memory_space<vmem>>, vector<8x128xf32>,
    %c0_i32_6 = arith.constant 0 : i32
    %9 = arith.cmpi eq, %arg1, %c0_i32_6 : i32
    %10 = arith.extui %9 : i1 to i32
    %c0_i32_7 = arith.constant 0 : i32
    %11 = arith.cmpi ne, %10, %c0_i32_7 : i32
    scf.if %11 {
      %c0_8 = arith.constant 0 : index
      %c0_9 = arith.constant 0 : index
      %12 = vector.load %arg4[%c0_8, %c0_9] : memref<8x128xf32, #tpu.memory_space<vmem>>, vector<8x128xf32>
      %cst_10 = arith.constant dense<0.000000e+00> : vector<128xf32>
      %13 = vector.multi_reduction <add>, %12, %cst_10 [0] : vector<8x128xf32> to vector<128xf32>
      %14 = vector.shape_cast %13 : vector<128xf32> to vector<1x128xf32>
      %c0_11 = arith.constant 0 : index
      %c0_12 = arith.constant 0 : index
      %15 = vector.load %arg3[%c0_11, %c0_12] : memref<1x128xf32, #tpu.memory_space<vmem>>, vector<1x128xf32>
      tpu.vector_store %arg3[%c0_11, %c0_12], %14 {strides = array<i32>} : memref<1x128xf32, #tpu.memory_space<vmem>>, vector<1x128xf32>,
    } else {
    }
    return
  }
  func.func @transform_0(%arg0: i32, %arg1: i32) -> (i32, i32) {
    %c1_i32 = arith.constant 1 : i32
    %0 = arith.muli %arg0, %c1_i32 : i32
    %1 = arith.addi %0, %arg1 : i32
    %c0_i32 = arith.constant 0 : i32
    %c0_i32_0 = arith.constant 0 : i32
    return %1, %c0_i32 : i32, i32
  }
  func.func @transform_1(%arg0: i32, %arg1: i32) -> (i32, i32) {
    %c0_i32 = arith.constant 0 : i32
    %c0_i32_0 = arith.constant 0 : i32
    return %arg0, %c0_i32 : i32, i32
  }
}

</mosaic_0001>

<llo_original>
// kernel: tpu_custom_call.1
$region0: #{tpu_custom_call.1}
  #allocation0 [shape = 'u32[]', space=smem, size = 0x4, offset = 0x4, fixed_abs, tag = 'smem constant byte address 0x4 - core index']
  #allocation1 [shape = 'u32[72,128]{1,0:T(1,128)}', space=vmem, size = 0x9000, scoped, tag = 'internal scratch']
  #allocation2 [shape = 'f32[8,128]{1,0:T(8,128)}', space=vmem, size = 0x1000, scoped, tag = 'scratch operand']
  %s0 = inlined_call_operand.hbm [shape: f32[16,128], index: 0, kind: input, shape index: {}]
  %s1 = inlined_call_operand.hbm [shape: f32[1,128], index: 1, kind: output, shape index: {}]
  %s2 = sld [smem:[#allocation0]]
  $region26: #{tpu_custom_call.1} parent=0
    _
  %s4 = ssub.s32 1, %s2
  %s5 = scalar_select 0, %s4, %s2
  $region1: #{tpu_custom_call.1} parent=0
    #allocation3 [shape = 'u8[8192]{0}', space=vmem, size = 0x2000, scoped, tag = 'input window, operand 0, single buffered']
    #allocation4 [shape = 's32[1]{0}', space=sflag, size = 0x4, scoped, tag = 'scoped memory for tpu_custom_call.1']
    #allocation5 [shape = 's32[1]{0}', space=sflag, size = 0x4, scoped, tag = 'scoped memory for tpu_custom_call.1']
    #allocation6 [shape = 'u8[512]{0}', space=vmem, size = 0x400, scoped, tag = 'output window, operand 0, single buffered']
    %6 = vsyncpa [#allocation4], 0
    %7 = vsyncpa [#allocation5], 0
    // Predicated region
    $region2: #{tpu_custom_call.1} parent=1 // pred_check
      _
    $region3: #{tpu_custom_call.1} parent=1 // pred_check_branch
      %9 = sbr.rel (0) target = $region5
    $region4: #{tpu_custom_call.1} parent=1 // pred_region
      %s10 = sadd.s32 0, 0
      %s11 = smul.u32 2, %s10
      %13 = vsyncadd [#allocation4], 0
      %s14 = smul.addr %s11, 8
      %s15 = scalar_lea.hbm %s0, %s14
      %s16 = sshll.u32 %s15, 4
      %s17 = int_to_ptr.hbm [resolvable:$true] %s16
      %s18 = sshll.u32 [#allocation3], 4
      %s19 = int_to_ptr.vmem [resolvable:$true] %s18
      %24 = dma.hbm_to_vmem [thread:$0]  %s17, 256, %s19, [#allocation4], 128, 128, 8
    $region5: #{tpu_custom_call.1} parent=1 // pred_fallthru
      _
    // Predicated region
    $region6: #{tpu_custom_call.1} parent=1 // pred_check
      _
    $region7: #{tpu_custom_call.1} parent=1 // pred_check_branch
      %26 = sbr.rel (0) target = $region9
    $region8: #{tpu_custom_call.1} parent=1 // pred_region
      %28 = dma.done [#allocation4], 256
    $region9: #{tpu_custom_call.1} parent=1 // pred_fallthru
      _
    %s29 = sadd.s32 0, 0
    %s30 = smul.u32 2, %s29
    %p31 = scmp.eq.s32.totalorder 0, 0
    // Predicated region
    $region10: #{tpu_custom_call.1} parent=1 // pred_check
      %p32 = pneg %p31
    $region11: #{tpu_custom_call.1} parent=1 // pred_check_branch
      %34 = sbr.rel (%p32) target = $region13
    $region12: #{tpu_custom_call.1} parent=1 // pred_region
      %35 = vst [vmem:[#allocation2] sm:$0xff] 0.0
    $region13: #{tpu_custom_call.1} parent=1 // pred_fallthru
      _
    %v36 = vld [vmem:[#allocation3] sm:$0xff]
    %v37 = vld [vmem:[#allocation3 + $0x8] sm:$0xff]
    %v38 = vld [vmem:[#allocation2] sm:$0xff]
    %v39 = vadd.f32 %v36, %v37
    %v40 = vadd.f32 %v38, %v39
    %41 = vst [vmem:[#allocation2] sm:$0xff] %v40
    // Predicated region
    $region14: #{tpu_custom_call.1} parent=1 // pred_check
      %p42 = pneg %p31
    $region15: #{tpu_custom_call.1} parent=1 // pred_check_branch
      %44 = sbr.rel (%p42) target = $region17
    $region16: #{tpu_custom_call.1} parent=1 // pred_region
      %v45 = vld [vmem:[#allocation2] sm:$0xff]
      %v46 = vrot.slane %v45, 4
      %v47 = vadd.f32 %v45, %v46
      %v48 = vrot.slane %v47, 2
      %v49 = vadd.f32 %v47, %v48
      %v50 = vrot.slane %v49, 1
      %v51 = vadd.f32 %v49, %v50
      %52 = vst [vmem:[#allocation6] sm:$0x1] %v51
    $region17: #{tpu_custom_call.1} parent=1 // pred_fallthru
      _
    // Predicated region
    $region18: #{tpu_custom_call.1} parent=1 // pred_check
      _
    $region19: #{tpu_custom_call.1} parent=1 // pred_check_branch
      %54 = sbr.rel (0) target = $region21
    $region20: #{tpu_custom_call.1} parent=1 // pred_region
      %56 = vsyncadd [#allocation5], 0
      %s58 = sshll.u32 [#allocation6], 4
      %s59 = int_to_ptr.vmem [resolvable:$true] %s58
      %s60 = sshll.u32 %s1, 4
      %s61 = int_to_ptr.hbm [resolvable:$true] %s60
      %63 = dma.vmem_to_hbm [thread:$0]  %s59, 16, %s61, [#allocation5]
    $region21: #{tpu_custom_call.1} parent=1 // pred_fallthru
      _
    // Predicated region
    $region22: #{tpu_custom_call.1} parent=1 // pred_check
      _
    $region23: #{tpu_custom_call.1} parent=1 // pred_check_branch
      %65 = sbr.rel (0) target = $region25
    $region24: #{tpu_custom_call.1} parent=1 // pred_region
      %67 = dma.done [#allocation5], 16
    $region25: #{tpu_custom_call.1} parent=1 // pred_fallthru
      _
    %68 = vsyncpa [#allocation4], 1
    %69 = vsyncpa [#allocation5], 1

</llo_original>
